<compile_context>
chip_gen: v5e
topology: v5e:2x2
jax: 0.10.0
libtpu: 0.0.40
codegen_flags: <defaults>
</compile_context>

<pallas_src>
import functools

import jax
import jax.numpy as jnp
from jax.experimental import pallas as pl
from jax.experimental.pallas import tpu as pltpu

_LANE = 128


def _round_up(n: int, m: int) -> int:
    return ((n + m - 1) // m) * m


def _cdiv(a: int, b: int) -> int:
    return -(-a // b)


# --------------------------------------------------------------------------- #
# One-time probes (import time, off the hot path).
# --------------------------------------------------------------------------- #
def _probe_weight_pipeline_mode():
    """Check once whether this Pallas build supports single-buffering grid-invariant
    operands via pipeline_mode=pl.Buffered(1). Isolated tiny compile; cannot mask
    errors of the real kernel."""
    if not hasattr(pl, "Buffered"):
        return None
    try:
        mode = pl.Buffered(1)

        def _k(a_ref, o_ref):
            o_ref[...] = a_ref[...] * 2.0

        probe = pl.pallas_call(
            _k,
            out_shape=jax.ShapeDtypeStruct((16, _LANE), jnp.float32),
            grid_spec=pltpu.PrefetchScalarGridSpec(
                num_scalar_prefetch=0,
                grid=(2,),
                in_specs=[pl.BlockSpec((8, _LANE), lambda i: (0, 0),
                                       pipeline_mode=mode)],
                out_specs=pl.BlockSpec((8, _LANE), lambda i: (i, 0)),
            ),
        )
        jax.block_until_ready(probe(jnp.zeros((8, _LANE), jnp.float32)))
        return mode
    except Exception:
        return None


def _probe_tpu():
    """Generation-aware VMEM budget and TensorCore count."""
    vmem_bytes = None
    try:
        info = pltpu.get_tpu_info()
        vmem_bytes = int(getattr(info, "vmem_capacity_bytes"))
    except Exception:
        vmem_bytes = None
    kind = ""
    try:
        kind = str(getattr(jax.devices()[0], "device_kind", "")).lower()
    except Exception:
        pass
    if vmem_bytes is None:
        vmem_bytes = 64 * 1024 * 1024          # conservative: fits every generation
    num_tc = 1
    if "v7" in kind:
        num_tc = 2
        vmem_bytes = min(vmem_bytes, 64 * 1024 * 1024)
    # leave ~18% headroom for compiler-internal scratch.
    return int(vmem_bytes * 0.82), num_tc


_WEIGHT_PIPELINE_MODE = _probe_weight_pipeline_mode()
_VMEM_BUDGET, _NUM_TENSORCORES = _probe_tpu()


# --------------------------------------------------------------------------- #
# Kernels.
# --------------------------------------------------------------------------- #
def _mxu_dot(a, w_ref, dot_dtype):
    """MXU matmul with f32 accumulation; operands fed in their native dtype unless
    an explicit dot_dtype (e.g. bf16 on v6e/v7x) is requested."""
    w = w_ref[...]
    if dot_dtype is not None:
        a = a.astype(dot_dtype)
        w = w.astype(dot_dtype)
    elif a.dtype != w.dtype:
        a = a.astype(w.dtype)
    return jnp.dot(a, w, preferred_element_type=jnp.float32)


def _resident_kernel(x_ref, w1_ref, b1_ref, w2_ref, b2_ref, o_ref, *, dot_dtype):
    """Fused out = relu(relu(x @ w1 + b1) @ w2 + b2) + x, weights fully resident."""
    x = x_ref[...]
    h = _mxu_dot(x, w1_ref, dot_dtype)
    h = jnp.maximum(h + b1_ref[...].astype(jnp.float32), 0.0)
    y = _mxu_dot(h, w2_ref, dot_dtype)
    y = jnp.maximum(y + b2_ref[...].astype(jnp.float32), 0.0)
    o_ref[...] = (y + x.astype(jnp.float32)).astype(o_ref.dtype)


def _htiled_kernel(x_ref, w1_ref, b1_ref, w2_ref, b2_ref, o_ref, acc_ref, *,
                   dot_dtype):
    """Hidden-dim-tiled path: accumulate partial fc2 products over H tiles in an
    f32 scratch; bias2 + ReLU + residual on the last H step."""
    hk = pl.program_id(1)

    @pl.when(hk == 0)
    def _():
        acc_ref[...] = jnp.zeros_like(acc_ref)

    x = x_ref[...]
    h = _mxu_dot(x, w1_ref, dot_dtype)
    h = jnp.maximum(h + b1_ref[...].astype(jnp.float32), 0.0)
    acc_ref[...] += _mxu_dot(h, w2_ref, dot_dtype)

    @pl.when(hk == pl.num_programs(1) - 1)
    def _():
        y = jnp.maximum(acc_ref[...] + b2_ref[...].astype(jnp.float32), 0.0)
        o_ref[...] = (y + x.astype(jnp.float32)).astype(o_ref.dtype)


# --------------------------------------------------------------------------- #
# Parameter preparation (one-time, outside the hot path).
# --------------------------------------------------------------------------- #
def prepare_params(fc1_weight, fc1_bias, fc2_weight, fc2_bias, dtype=None):
    """Takes torch.nn.Linear-layout params (fc1.weight: [H, D], fc2.weight: [D, H]),
    transposes to matmul layout and zero-pads the hidden dim to a multiple of 128.
    Optionally casts weights/biases once (e.g. jnp.bfloat16 for v6e/v7x MXU rate)."""
    H, D = fc1_weight.shape
    assert fc2_weight.shape == (D, H)
    Hp = _round_up(max(H, 1), _LANE)
    w1 = jnp.asarray(fc1_weight).T                      # [D, H]
    w2 = jnp.asarray(fc2_weight).T                      # [H, D]
    b1 = jnp.reshape(jnp.asarray(fc1_bias), (1, H))
    b2 = jnp.reshape(jnp.asarray(fc2_bias), (1, D))
    if Hp != H:
        w1 = jnp.pad(w1, ((0, 0), (0, Hp - H)))
        b1 = jnp.pad(b1, ((0, 0), (0, Hp - H)))
        w2 = jnp.pad(w2, ((0, Hp - H), (0, 0)))
    if dtype is not None:
        w1, w2, b1, b2 = (a.astype(dtype) for a in (w1, w2, b1, b2))
    return {"w1": w1, "b1": b1, "w2": w2, "b2": b2}


# --------------------------------------------------------------------------- #
# Host wrapper.
# --------------------------------------------------------------------------- #
def residual_block(x, params, *, batch_tile=None, h_tile=None, dot_dtype=None):
    """x: [B, D]; params from prepare_params (w1:[D,Hp], b1:[1,Hp], w2:[Hp,D], b2:[1,D])."""
    w1, b1, w2, b2 = params["w1"], params["b1"], params["w2"], params["b2"]
    B, D = x.shape
    Hp = w1.shape[1]
    assert w1.shape == (D, Hp) and w2.shape == (Hp, D)
    assert b1.shape == (1, Hp) and b2.shape == (1, D)

    in_b = x.dtype.itemsize
    out_b = in_b
    w_b = w1.dtype.itemsize
    budget = _VMEM_BUDGET
    num_tc = _NUM_TENSORCORES
    wbuf = 1 if _WEIGHT_PIPELINE_MODE is not None else 2   # fallback => 2x weight VMEM
    headroom = 2 * 1024 * 1024
    sub = {4: 8, 2: 16, 1: 32}.get(in_b, 8)                 # sublane packing unit
    tile_cap = 512

    # ---- batch tiling --------------------------------------------------------
    if batch_tile is None:
        if num_tc >= 2 and B >= 64:
            # v7x: split the batch across both TensorCores (>= 2 parallel steps).
            batch_tile = min(tile_cap, _round_up(_cdiv(B, num_tc), sub))
        elif B <= tile_cap:
            batch_tile = B                                   # 1 step, no batch padding
        else:
            batch_tile = tile_cap
    else:
        batch_tile = max(1, min(int(batch_tile), _round_up(B, sub)))
    if batch_tile != B:
        batch_tile = max(sub, _round_up(batch_tile, sub))
    Bp = _round_up(B, batch_tile)
    steps = Bp // batch_tile

    # ---- path selection: resident weights vs H-tiled accumulator -------------
    def act_bytes(bt, h_cols):
        # double-buffered x/out tiles + f32 hidden tile + f32 accumulator/residual temp
        return 2 * bt * D * in_b + 2 * bt * D * out_b + bt * h_cols * 4 + bt * D * 4

    resident_w_bytes = wbuf * (D * Hp + Hp * D + Hp + D) * w_b
    use_resident = (h_tile is None and
                    resident_w_bytes + act_bytes(batch_tile, Hp) + headroom <= budget)

    if h_tile is None and not use_resident:
        # shrink the batch tile before abandoning resident weights
        bt = batch_tile
        while bt > max(sub, 64):
            bt = max(sub, _round_up(bt // 2, sub))
            if resident_w_bytes + act_bytes(bt, Hp) + headroom <= budget:
                batch_tile = bt
                Bp = _round_up(B, batch_tile)
                steps = Bp // batch_tile
                use_resident = True
                break

    if use_resident:
        th, h_steps = Hp, 1
    else:
        if h_tile is not None:
            th = min(_round_up(int(h_tile), _LANE), Hp)
            while Hp % th != 0:
                th -= _LANE
        else:
            th = None
            for k in range(Hp // _LANE, 0, -1):
                cand = k * _LANE
                if Hp % cand:
                    continue
                w_slab = (2 * (D * cand + cand * D + cand) + D) * w_b
                if w_slab + act_bytes(batch_tile, cand) + headroom <= budget:
                    th = cand
                    break
            if th is None:
                th = _LANE
                while (batch_tile > max(sub, 64)
                       and (2 * (D * th + th * D + th) + D) * w_b
                       + act_bytes(batch_tile, th) + headroom > budget):
                    batch_tile = max(sub, _round_up(batch_tile // 2, sub))
                    Bp = _round_up(B, batch_tile)
                    steps = Bp // batch_tile
        h_steps = Hp // th

    # ---- build the call -------------------------------------------------------
    x_in = x if Bp == B else jnp.pad(x, ((0, Bp - B), (0, 0)))

    wkw = ({"pipeline_mode": _WEIGHT_PIPELINE_MODE}
           if _WEIGHT_PIPELINE_MODE is not None else {})

    cost = pl.CostEstimate(
        flops=4 * Bp * D * Hp,
        transcendentals=0,
        bytes_accessed=int(Bp * D * in_b + Bp * D * out_b
                           + (D * Hp + Hp * D + Hp + D) * w_b),
    )

    if use_resident:
        kernel = functools.partial(_resident_kernel, dot_dtype=dot_dtype)
        grid = (steps,)
        in_specs = [
            pl.BlockSpec((batch_tile, D), lambda i: (i, 0)),
            pl.BlockSpec((D, Hp), lambda i: (0, 0), **wkw),
            pl.BlockSpec((1, Hp), lambda i: (0, 0), **wkw),
            pl.BlockSpec((Hp, D), lambda i: (0, 0), **wkw),
            pl.BlockSpec((1, D), lambda i: (0, 0), **wkw),
        ]
        out_specs = pl.BlockSpec((batch_tile, D), lambda i: (i, 0))
        scratch = []
        semantics = ("parallel",)
    else:
        kernel = functools.partial(_htiled_kernel, dot_dtype=dot_dtype)
        grid = (steps, h_steps)
        in_specs = [
            pl.BlockSpec((batch_tile, D), lambda i, k: (i, 0)),
            pl.BlockSpec((D, th), lambda i, k: (0, k)),
            pl.BlockSpec((1, th), lambda i, k: (0, k)),
            pl.BlockSpec((th, D), lambda i, k: (k, 0)),
            pl.BlockSpec((1, D), lambda i, k: (0, 0), **wkw),
        ]
        out_specs = pl.BlockSpec((batch_tile, D), lambda i, k: (i, 0))
        scratch = [pltpu.VMEM((batch_tile, D), jnp.float32)]
        semantics = ("parallel", "arbitrary")

    out_p = pl.pallas_call(
        kernel,
        out_shape=jax.ShapeDtypeStruct((Bp, D), x.dtype),
        grid_spec=pltpu.PrefetchScalarGridSpec(
            num_scalar_prefetch=0,
            grid=grid,
            in_specs=in_specs,
            out_specs=out_specs,
            scratch_shapes=scratch,
        ),
        compiler_params=pltpu.CompilerParams(
            dimension_semantics=semantics,
            vmem_limit_bytes=budget,
        ),
        cost_estimate=cost,
    )(x_in, w1, b1, w2, b2)

    return out_p if Bp == B else out_p[:B]


# --------------------------------------------------------------------------- #
# Test.
# --------------------------------------------------------------------------- #
if __name__ == "__main__":
    # Shapes consistent with the module's forward: x is [batch, input_dim].
    batch, input_dim, hidden = 16, 32, 64

    key = jax.random.PRNGKey(0)
    k_x, k_w1, k_b1, k_w2, k_b2 = jax.random.split(key, 5)
    x = jax.random.normal(k_x, (batch, input_dim), dtype=jnp.float32)
    # torch.nn.Linear-layout synthetic params.
    fc1_w = jax.random.normal(k_w1, (hidden, input_dim), dtype=jnp.float32) * 0.1
    fc1_b = jax.random.normal(k_b1, (hidden,), dtype=jnp.float32) * 0.1
    fc2_w = jax.random.normal(k_w2, (input_dim, hidden), dtype=jnp.float32) * 0.1
    fc2_b = jax.random.normal(k_b2, (input_dim,), dtype=jnp.float32) * 0.1

    def reference(xx, w_a, b_a, w_b_, b_b_):
        h = jnp.maximum(xx @ w_a.T + b_a, 0.0)
        y = jnp.maximum(h @ w_b_.T + b_b_, 0.0)
        return y + xx

    params = prepare_params(fc1_w, fc1_b, fc2_w, fc2_b)   # one-time, off the hot path
    out = jax.block_until_ready(residual_block(x, params))
    ref = reference(x, fc1_w, fc1_b, fc2_w, fc2_b)
    assert out.shape == (batch, input_dim)
    assert jnp.allclose(out, ref, atol=1e-4, rtol=1e-4), "resident path mismatch"

    # Exercise the H-tiled accumulator fallback (v7x large-weight path) at small scale:
    # multi-step batch grid with padding + 2 hidden-dim steps.
    b2_, d2_, h2_ = 20, 32, 256
    k_x2, k_a, k_ab, k_c, k_cb = jax.random.split(jax.random.PRNGKey(1), 5)
    x2 = jax.random.normal(k_x2, (b2_, d2_), dtype=jnp.float32)
    g1_w = jax.random.normal(k_a, (h2_, d2_), dtype=jnp.float32) * 0.1
    g1_b = jax.random.normal(k_ab, (h2_,), dtype=jnp.float32) * 0.1
    g2_w = jax.random.normal(k_c, (d2_, h2_), dtype=jnp.float32) * 0.1
    g2_b = jax.random.normal(k_cb, (d2_,), dtype=jnp.float32) * 0.1
    params2 = prepare_params(g1_w, g1_b, g2_w, g2_b)
    out2 = jax.block_until_ready(
        residual_block(x2, params2, batch_tile=8, h_tile=128))
    ref2 = reference(x2, g1_w, g1_b, g2_w, g2_b)
    assert out2.shape == (b2_, d2_)
    assert jnp.allclose(out2, ref2, atol=1e-4, rtol=1e-4), "H-tiled path mismatch"

    print("KERNEL_OK")
</pallas_src>

<mosaic_0001>
module attributes {stable_mosaic.version = 11 : i64} {
  func.func @_k(%arg0: i32, %arg1: memref<8x128xf32, #tpu.memory_space<vmem>>, %arg2: memref<8x128xf32, #tpu.memory_space<vmem>>) attributes {dimension_semantics = [#tpu.dimension_semantics<arbitrary>], iteration_bounds = array<i64: 2>, scalar_prefetch = 0 : i64, scratch_operands = 0 : i64, tpu.core_type = #tpu.core_type<tc>, window_params = [{pipeline_mode = #tpu.pipeline_mode<synchronous>, transform_indices = @transform_0, window_bounds = array<i64: 8, 128>}, {transform_indices = @transform_1, window_bounds = array<i64: 8, 128>}]} {
    %c0 = arith.constant 0 : index
    %c0_0 = arith.constant 0 : index
    %0 = vector.load %arg1[%c0, %c0_0] : memref<8x128xf32, #tpu.memory_space<vmem>>, vector<8x128xf32>
    %cst = arith.constant 2.000000e+00 : f32
    %1 = vector.broadcast %cst : f32 to vector<8x128xf32>
    %2 = arith.mulf %0, %1 : vector<8x128xf32>
    %c0_1 = arith.constant 0 : index
    %c0_2 = arith.constant 0 : index
    %3 = vector.load %arg2[%c0_1, %c0_2] : memref<8x128xf32, #tpu.memory_space<vmem>>, vector<8x128xf32>
    tpu.vector_store %arg2[%c0_1, %c0_2], %2 {strides = array<i32>} : memref<8x128xf32, #tpu.memory_space<vmem>>, vector<8x128xf32>,
    return
  }
  func.func @transform_0(%arg0: i32) -> (i32, i32) {
    %c0_i32 = arith.constant 0 : i32
    %c0_i32_0 = arith.constant 0 : i32
    %c0_i32_1 = arith.constant 0 : i32
    return %c0_i32, %c0_i32_0 : i32, i32
  }
  func.func @transform_1(%arg0: i32) -> (i32, i32) {
    %c0_i32 = arith.constant 0 : i32
    %c0_i32_0 = arith.constant 0 : i32
    return %arg0, %c0_i32 : i32, i32
  }
}

module attributes {stable_mosaic.version = 11 : i64} {
  func.func @_resident_kernel(%arg0: i32, %arg1: memref<16x32xf32, #tpu.memory_space<vmem>>, %arg2: memref<32x128xf32, #tpu.memory_space<vmem>>, %arg3: memref<1x128xf32, #tpu.memory_space<vmem>>, %arg4: memref<128x32xf32, #tpu.memory_space<vmem>>, %arg5: memref<1x32xf32, #tpu.memory_space<vmem>>, %arg6: memref<16x32xf32, #tpu.memory_space<vmem>>) attributes {dimension_semantics = [#tpu.dimension_semantics<parallel>], iteration_bounds = array<i64: 1>, scalar_prefetch = 0 : i64, scratch_operands = 0 : i64, tpu.core_type = #tpu.core_type<tc>, window_params = [{transform_indices = @transform_0, window_bounds = array<i64: 16, 32>}, {pipeline_mode = #tpu.pipeline_mode<synchronous>, transform_indices = @transform_1, window_bounds = array<i64: 32, 128>}, {pipeline_mode = #tpu.pipeline_mode<synchronous>, transform_indices = @transform_2, window_bounds = array<i64: 1, 128>}, {pipeline_mode = #tpu.pipeline_mode<synchronous>, transform_indices = @transform_3, window_bounds = array<i64: 128, 32>}, {pipeline_mode = #tpu.pipeline_mode<synchronous>, transform_indices = @transform_4, window_bounds = array<i64: 1, 32>}, {transform_indices = @transform_5, window_bounds = array<i64: 16, 32>}]} {
    %c0 = arith.constant 0 : index
    %c0_0 = arith.constant 0 : index
    %0 = vector.load %arg1[%c0, %c0_0] : memref<16x32xf32, #tpu.memory_space<vmem>>, vector<16x32xf32>
    %c0_1 = arith.constant 0 : index
    %c0_2 = arith.constant 0 : index
    %1 = vector.load %arg2[%c0_1, %c0_2] : memref<32x128xf32, #tpu.memory_space<vmem>>, vector<32x128xf32>
    %cst = arith.constant dense<0.000000e+00> : vector<16x128xf32>
    %2 = tpu.matmul %0, %1, %cst {dimension_numbers = #tpu.dot_dimension_numbers<[1], [0], [0], [1], [0, 0, 1, 1], [], []>} : vector<16x32xf32>, vector<32x128xf32>, vector<16x128xf32> -> vector<16x128xf32>
    %c0_3 = arith.constant 0 : index
    %c0_4 = arith.constant 0 : index
    %3 = vector.load %arg3[%c0_3, %c0_4] : memref<1x128xf32, #tpu.memory_space<vmem>>, vector<1x128xf32>
    %4 = vector.broadcast %3 : vector<1x128xf32> to vector<16x128xf32>
    %5 = arith.addf %2, %4 : vector<16x128xf32>
    %cst_5 = arith.constant 0.000000e+00 : f32
    %6 = vector.broadcast %cst_5 : f32 to vector<16x128xf32>
    %7 = arith.maximumf %5, %6 : vector<16x128xf32>
    %c0_6 = arith.constant 0 : index
    %c0_7 = arith.constant 0 : index
    %8 = vector.load %arg4[%c0_6, %c0_7] : memref<128x32xf32, #tpu.memory_space<vmem>>, vector<128x32xf32>
    %cst_8 = arith.constant dense<0.000000e+00> : vector<16x32xf32>
    %9 = tpu.matmul %7, %8, %cst_8 {dimension_numbers = #tpu.dot_dimension_numbers<[1], [0], [0], [1], [0, 0, 1, 1], [], []>} : vector<16x128xf32>, vector<128x32xf32>, vector<16x32xf32> -> vector<16x32xf32>
    %c0_9 = arith.constant 0 : index
    %c0_10 = arith.constant 0 : index
    %10 = vector.load %arg5[%c0_9, %c0_10] : memref<1x32xf32, #tpu.memory_space<vmem>>, vector<1x32xf32>
    %11 = vector.broadcast %10 : vector<1x32xf32> to vector<16x32xf32>
    %12 = arith.addf %9, %11 : vector<16x32xf32>
    %cst_11 = arith.constant 0.000000e+00 : f32
    %13 = vector.broadcast %cst_11 : f32 to vector<16x32xf32>
    %14 = arith.maximumf %12, %13 : vector<16x32xf32>
    %15 = arith.addf %14, %0 : vector<16x32xf32>
    %c0_12 = arith.constant 0 : index
    %c0_13 = arith.constant 0 : index
    %16 = vector.load %arg6[%c0_12, %c0_13] : memref<16x32xf32, #tpu.memory_space<vmem>>, vector<16x32xf32>
    tpu.vector_store %arg6[%c0_12, %c0_13], %15 {strides = array<i32>} : memref<16x32xf32, #tpu.memory_space<vmem>>, vector<16x32xf32>,
    return
  }
  func.func @transform_0(%arg0: i32) -> (i32, i32) {
    %c0_i32 = arith.constant 0 : i32
    %c0_i32_0 = arith.constant 0 : i32
    return %arg0, %c0_i32 : i32, i32
  }
  func.func @transform_1(%arg0: i32) -> (i32, i32) {
    %c0_i32 = arith.constant 0 : i32
    %c0_i32_0 = arith.constant 0 : i32
    %c0_i32_1 = arith.constant 0 : i32
    return %c0_i32, %c0_i32_0 : i32, i32
  }
  func.func @transform_2(%arg0: i32) -> (i32, i32) {
    %c0_i32 = arith.constant 0 : i32
    %c0_i32_0 = arith.constant 0 : i32
    %c0_i32_1 = arith.constant 0 : i32
    return %c0_i32, %c0_i32_0 : i32, i32
  }
  func.func @transform_3(%arg0: i32) -> (i32, i32) {
    %c0_i32 = arith.constant 0 : i32
    %c0_i32_0 = arith.constant 0 : i32
    %c0_i32_1 = arith.constant 0 : i32
    return %c0_i32, %c0_i32_0 : i32, i32
  }
  func.func @transform_4(%arg0: i32) -> (i32, i32) {
    %c0_i32 = arith.constant 0 : i32
    %c0_i32_0 = arith.constant 0 : i32
    %c0_i32_1 = arith.constant 0 : i32
    return %c0_i32, %c0_i32_0 : i32, i32
  }
  func.func @transform_5(%arg0: i32) -> (i32, i32) {
    %c0_i32 = arith.constant 0 : i32
    %c0_i32_0 = arith.constant 0 : i32
    return %arg0, %c0_i32 : i32, i32
  }
}

</mosaic_0001>

<llo_original>
// kernel: tpu_custom_call.1
$region0: #{tpu_custom_call.1}
  #allocation0 [shape = 'u32[]', space=smem, size = 0x4, offset = 0x4, fixed_abs, tag = 'smem constant byte address 0x4 - core index']
  #allocation1 [shape = 'u32[72,128]{1,0:T(1,128)}', space=vmem, size = 0x9000, scoped, tag = 'internal scratch']
  %s0 = inlined_call_operand.hbm [shape: f32[8,128], index: 0, kind: input, shape index: {}]
  %s1 = inlined_call_operand.hbm [shape: f32[16,128], index: 1, kind: output, shape index: {}]
  %s2 = sld [smem:[#allocation0]]
  $region41: #{tpu_custom_call.1} parent=0
    _
  %s4 = ssub.s32 1, %s2
  %s5 = scalar_select 0, %s4, %s2
  $region1: #{tpu_custom_call.1} parent=0
    #allocation2 [shape = 'u8[4096]{0}', space=vmem, size = 0x1000, scoped, tag = 'input window, operand 0, single buffered']
    #allocation3 [shape = 's32[2]{0}', space=sflag, size = 0x8, scoped, tag = 'scoped memory for tpu_custom_call.1']
    #allocation4 [shape = 's32[2]{0}', space=sflag, size = 0x8, scoped, tag = 'scoped memory for tpu_custom_call.1']
    #allocation5 [shape = 'u8[8192]{0}', space=vmem, size = 0x2000, scoped, tag = 'output window, operand 0']
    %6 = vsyncpa [#allocation3], 0
    %7 = vsyncpa [#allocation4], 0
    %s8 = scalar_lea.sflag [#allocation4], 1
    %9 = vsyncpa %s8, 0
    loop: start=0, step=1, limit=4
    $region2: #{tpu_custom_call.1} parent=1 // loop_pre_header
      _
    $region3: #{tpu_custom_call.1} parent=1 // loop_header
      %s11 = sphi 0, %s15
      %p12 = scmp.ge.s32.totalorder %s11, 4
      %s19 = sphi 0, %s19
      %s21 = sphi 0, %s19
      %s22 = sphi 0, %s21
      %s36 = sphi 0, %s22
      %s42 = sphi 0, %s44
      %s45 = sphi 0, %s42
      %s46 = sphi 0, %s45
      %s62 = sphi 0, %s46
    $region4: #{tpu_custom_call.1} parent=1 // loop_header_branch
      %14 = sbr.rel (%p12) target = $region8
    $region5: #{tpu_custom_call.1} parent=1 // loop_body
      %s16 = ssub.s32 %s11, 1
      %s17 = ssub.s32 %s11, 2
      %s18 = sadd.s32 %s11, 1
      %s20 = sadd.s32 %s19, 1
      %p23 = scmp.eq.s32.totalorder %s11, 1
      %p24 = scmp.ne.s32.totalorder %s19, %s21
      %p25 = scmp.eq.s32.totalorder %s11, 0
      %p26 = por %p24, %p25
      %p27 = scmp.ne.s32.totalorder %s19, %s21
      %p28 = scmp.eq.s32.totalorder %s16, 1
      %p29 = por %p27, %p28
      %p30 = scmp.ne.s32.totalorder %s21, %s22
      %p31 = scmp.eq.s32.totalorder %s16, 0
      %p32 = por %p30, %p31
      %p33 = scmp.ne.s32.totalorder %s21, %s22
      %p34 = scmp.eq.s32.totalorder %s17, 1
      %p35 = por %p33, %p34
      %p37 = scmp.ne.s32.totalorder %s22, %s36
      %p38 = scmp.eq.s32.totalorder %s17, 0
      %p39 = por %p37, %p38
      %s40 = ssub.s32 %s11, %s18
      %p41 = scmp.eq.s32.totalorder %s40, 0
      %s43 = sadd.s32 %s42, 1
      %s44 = scalar_select %p41, %s42, %s43
      %p47 = pneg %p41
      %p48 = scmp.eq.s32.totalorder %s11, 1
      %p49 = por %p47, %p48
      %p50 = scmp.ne.s32.totalorder %s42, %s45
      %p51 = scmp.eq.s32.totalorder %s11, 0
      %p52 = por %p50, %p51
      %p53 = scmp.ne.s32.totalorder %s42, %s45
      %p54 = scmp.eq.s32.totalorder %s16, 1
      %p55 = por %p53, %p54
      %p56 = scmp.ne.s32.totalorder %s45, %s46
      %p57 = scmp.eq.s32.totalorder %s16, 0
      %p58 = por %p56, %p57
      %p59 = scmp.ne.s32.totalorder %s45, %s46
      %p60 = scmp.eq.s32.totalorder %s17, 1
      %p61 = por %p59, %p60
      %p63 = scmp.ne.s32.totalorder %s46, %s62
      %p64 = scmp.eq.s32.totalorder %s17, 0
      %p65 = por %p63, %p64
      %p66 = scmp.le.s32.totalorder 1, %s11
      %p67 = scmp.lt.s32.totalorder %s11, 3
      %p68 = pnand %p66, %p67
      %p69 = pneg %p68
      // Predicated region
      $region9: #{tpu_custom_call.1} parent=5 // pred_check
        _
      $region10: #{tpu_custom_call.1} parent=5 // pred_check_branch
        %71 = sbr.rel (%p68) target = $region12
      $region11: #{tpu_custom_call.1} parent=5 // pred_region
        %s72 = ssub.s32 %s11, 1
        // Predicated region
        $region13: #{tpu_custom_call.1} parent=11 // pred_check
          %p73 = pneg %p32
        $region14: #{tpu_custom_call.1} parent=11 // pred_check_branch
          %75 = sbr.rel (%p73) target = $region16
        $region15: #{tpu_custom_call.1} parent=11 // pred_region
          %77 = vsyncadd [#allocation3], 0
          %s79 = sshll.u32 %s0, 4
          %s80 = int_to_ptr.hbm [resolvable:$true] %s79
          %s81 = sshll.u32 [#allocation2], 4
          %s82 = int_to_ptr.vmem [resolvable:$true] %s81
          %84 = dma.hbm_to_vmem [thread:$0]  %s80, 128, %s82, [#allocation3]
        $region16: #{tpu_custom_call.1} parent=11 // pred_fallthru
          _
      $region12: #{tpu_custom_call.1} parent=5 // pred_fallthru
        _
      %p85 = scmp.lt.s32.totalorder %s11, 2
      // Predicated region
      $region17: #{tpu_custom_call.1} parent=5 // pred_check
        %p86 = pneg %p85
      $region18: #{tpu_custom_call.1} parent=5 // pred_check_branch
        %88 = sbr.rel (%p86) target = $region20
      $region19: #{tpu_custom_call.1} parent=5 // pred_region
        _
      $region20: #{tpu_custom_call.1} parent=5 // pred_fallthru
        _
      %p89 = scmp.le.s32.totalorder 1, %s11
      %p90 = scmp.lt.s32.totalorder %s11, 3
      %p91 = pnand %p89, %p90
      %p92 = pneg %p91
      // Predicated region
      $region21: #{tpu_custom_call.1} parent=5 // pred_check
        _
      $region22: #{tpu_custom_call.1} parent=5 // pred_check_branch
        %94 = sbr.rel (%p91) target = $region24
      $region23: #{tpu_custom_call.1} parent=5 // pred_region
        %s95 = ssub.s32 %s11, 1
        // Predicated region
        $region25: #{tpu_custom_call.1} parent=23 // pred_check
          %p96 = pneg %p32
        $region26: #{tpu_custom_call.1} parent=23 // pred_check_branch
          %98 = sbr.rel (%p96) target = $region28
        $region27: #{tpu_custom_call.1} parent=23 // pred_region
          %100 = dma.done [#allocation3], 128
        $region28: #{tpu_custom_call.1} parent=23 // pred_fallthru
          _
        %p101 = pneg %p32
        %p102 = pneg %p29
        %p103 = pneg %p58
        %p104 = pneg %p55
        %s105 = sand.u32 %s45, 1
        %s106 = scalar_lea.sflag [#allocation4], %s105
        %s107 = sand.u32 %s45, 1
        %s108 = smul.addr %s107, 8
        %s109 = scalar_lea.vmem [#allocation5], %s108
        %v110 = vld [vmem:[#allocation2] sm:$0xff]
        %v111 = vmul.f32 %v110, 2.0
        %112 = vst [vmem:[%s109] sm:$0xff] %v111
        %s113 = sand.u32 %s45, 1
        %s114 = scalar_lea.sflag [#allocation4], %s113
        %s115 = sand.u32 %s45, 1
        %s116 = smul.addr %s115, 8
        %s117 = scalar_lea.vmem [#allocation5], %s116
        // Predicated region
        $region29: #{tpu_custom_call.1} parent=23 // pred_check
          %p118 = pneg %p55
        $region30: #{tpu_custom_call.1} parent=23 // pred_check_branch
          %120 = sbr.rel (%p118) target = $region32
        $region31: #{tpu_custom_call.1} parent=23 // pred_region
          %122 = vsyncadd %s114, 0
          %s123 = smul.addr %s16, 8
          %s124 = scalar_lea.hbm %s1, %s123
          %s126 = sshll.u32 %s117, 4
          %s127 = int_to_ptr.vmem [resolvable:$true] %s126
          %s128 = sshll.u32 %s124, 4
          %s129 = int_to_ptr.hbm [resolvable:$true] %s128
          %131 = dma.vmem_to_hbm [thread:$0]  %s127, 128, %s129, %s114
        $region32: #{tpu_custom_call.1} parent=23 // pred_fallthru
          _
      $region24: #{tpu_custom_call.1} parent=5 // pred_fallthru
        _
      %p132 = scmp.le.s32.totalorder 2, %s11
      // Predicated region
      $region33: #{tpu_custom_call.1} parent=5 // pred_check
        %p133 = pneg %p132
      $region34: #{tpu_custom_call.1} parent=5 // pred_check_branch
        %135 = sbr.rel (%p133) target = $region36
      $region35: #{tpu_custom_call.1} parent=5 // pred_region
        %s136 = ssub.s32 %s11, 2
        // Predicated region
        $region37: #{tpu_custom_call.1} parent=35 // pred_check
          %p137 = pneg %p61
        $region38: #{tpu_custom_call.1} parent=35 // pred_check_branch
          %139 = sbr.rel (%p137) target = $region40
        $region39: #{tpu_custom_call.1} parent=35 // pred_region
          %s140 = sand.u32 %s46, 1
          %s141 = scalar_lea.sflag [#allocation4], %s140
          %s142 = sand.u32 %s46, 1
          %s143 = smul.addr %s142, 8
          %s144 = scalar_lea.vmem [#allocation5], %s143
          %146 = dma.done %s141, 128
        $region40: #{tpu_custom_call.1} parent=35 // pred_fallthru
          _
      $region36: #{tpu_custom_call.1} parent=5 // pred_fallthru
        _
    $region6: #{tpu_custom_call.1} parent=1 // loop_footer
      %s15 = sadd.s32 1, %s11
    $region7: #{tpu_custom_call.1} parent=1 // loop_footer_branch
      %10 = sbr.rel target = $region3
    $region8: #{tpu_custom_call.1} parent=1 // loop_exit
      _
    %147 = vsyncpa [#allocation3], 1
    %s148 = scalar_lea.sflag [#allocation3], 1
    %149 = vsyncpa %s148, 1
    %150 = vsyncpa [#allocation4], 1
    %s151 = scalar_lea.sflag [#allocation4], 1
    %152 = vsyncpa %s151, 1

// kernel: tpu_custom_call.1
$region0: #{tpu_custom_call.1}
  #allocation0 [shape = 'u32[]', space=smem, size = 0x4, offset = 0x4, fixed_abs, tag = 'smem constant byte address 0x4 - core index']
  #allocation1 [shape = 'u32[72,128]{1,0:T(1,128)}', space=vmem, size = 0x9000, scoped, tag = 'internal scratch']
  %s0 = inlined_call_operand.vmem [shape: f32[16,32], index: 0, kind: input, shape index: {}]
  %s1 = inlined_call_operand.vmem [shape: f32[32,128], index: 1, kind: input, shape index: {}]
  %s2 = inlined_call_operand.vmem [shape: f32[1,128], index: 2, kind: input, shape index: {}]
  %s3 = inlined_call_operand.vmem [shape: f32[128,32], index: 3, kind: input, shape index: {}]
  %s4 = inlined_call_operand.vmem [shape: f32[1,32], index: 4, kind: input, shape index: {}]
  %s5 = inlined_call_operand.hbm [shape: f32[16,32], index: 5, kind: output, shape index: {}]
  %s6 = sld [smem:[#allocation0]]
  $region30: #{tpu_custom_call.1} parent=0
    _
  %s8 = ssub.s32 1, %s6
  %s9 = scalar_select 0, %s8, %s6
  $region1: #{tpu_custom_call.1} parent=0
    #allocation2 [shape = 'u8[8192]{0}', space=vmem, size = 0x2000, scoped, tag = 'output window, operand 0, single buffered']
    #allocation3 [shape = 's32[1]{0}', space=sflag, size = 0x4, scoped, tag = 'scoped memory for tpu_custom_call.1']
    %10 = vsyncpa [#allocation3], 0
    // Predicated region
    $region2: #{tpu_custom_call.1} parent=1 // pred_check
      _
    $region3: #{tpu_custom_call.1} parent=1 // pred_check_branch
      %12 = sbr.rel (0) target = $region5
    $region4: #{tpu_custom_call.1} parent=1 // pred_region
      _
    $region5: #{tpu_custom_call.1} parent=1 // pred_fallthru
      _
    // Predicated region
    $region6: #{tpu_custom_call.1} parent=1 // pred_check
      _
    $region7: #{tpu_custom_call.1} parent=1 // pred_check_branch
      %14 = sbr.rel (0) target = $region9
    $region8: #{tpu_custom_call.1} parent=1 // pred_region
      _
    $region9: #{tpu_custom_call.1} parent=1 // pred_fallthru
      _
    // Predicated region
    $region10: #{tpu_custom_call.1} parent=1 // pred_check
      _
    $region11: #{tpu_custom_call.1} parent=1 // pred_check_branch
      %16 = sbr.rel (0) target = $region13
    $region12: #{tpu_custom_call.1} parent=1 // pred_region
      _
    $region13: #{tpu_custom_call.1} parent=1 // pred_fallthru
      _
    // Predicated region
    $region14: #{tpu_custom_call.1} parent=1 // pred_check
      _
    $region15: #{tpu_custom_call.1} parent=1 // pred_check_branch
      %18 = sbr.rel (0) target = $region17
    $region16: #{tpu_custom_call.1} parent=1 // pred_region
      _
    $region17: #{tpu_custom_call.1} parent=1 // pred_fallthru
      _
    // Predicated region
    $region18: #{tpu_custom_call.1} parent=1 // pred_check
      _
    $region19: #{tpu_custom_call.1} parent=1 // pred_check_branch
      %20 = sbr.rel (0) target = $region21
    $region20: #{tpu_custom_call.1} parent=1 // pred_region
      _
    $region21: #{tpu_custom_call.1} parent=1 // pred_fallthru
      _
    %v21 = vld [vmem:[%s0] sm:$0xff]
    %v22 = vld [vmem:[%s0 + $0x8] sm:$0xff]
    %v23 = vld [vmem:[%s1] sm:$0xff]
    %v24 = vld [vmem:[%s1 + $0x8] sm:$0xff]
    %v25 = vld [vmem:[%s1 + $0x10] sm:$0xff]
    %v26 = vld [vmem:[%s1 + $0x18] sm:$0xff]
    %v27 = vld [vmem:[%s2] sm:$0x1]
    %v29 = vperm.slane %v27, 0
    %vm31 = vcmask 261120
    %v33 = vsel %vm31, %v21, 0
    %v36 = vsel %vm31, %v22, 0
    %38 = vmatpush.msra.mxu0 0.0
    %39 = vmatpush.msra.mxu0 0.0
    %40 = vmatpush.msra.mxu0 0.0
    %41 = vmatpush.msra.mxu0 0.0
    %42 = vmatpush.msra.mxu0 0.0
    %43 = vmatpush.msra.mxu0 0.0
    %44 = vmatpush.msra.mxu0 0.0
    %45 = vmatpush.msra.mxu0 0.0
    %46 = vmatpush.msra.mxu0 0.0
    %47 = vmatpush.msra.mxu0 0.0
    %48 = vmatpush.msra.mxu0 0.0
    %49 = vmatpush.msra.mxu0 0.0
    %50 = vmatpush.msra.mxu0 %v26
    %51 = vmatpush.msra.mxu0 %v25
    %52 = vmatpush.msra.mxu0 %v24
    %53 = vmatpush.msra.mxu0 %v23
    %54 = vmatmul.f32.gmra.mxu0 %v33
    %v55 = vpop.f32.mrf.mxu0
    %v56 = vadd.f32 %v29, %v55
    %57 = vmatmul.f32.gmra.mxu0 %v36
    %v58 = vpop.f32.mrf.mxu0
    %v59 = vadd.f32 %v29, %v58
    %60 = vdwg.mxu0
    %v61 = vmax.f32 %v56, 0.0
    %v62 = vmax.f32 %v59, 0.0
    %v63 = vld [vmem:[%s3] sm:$0xff]
    %v64 = vld [vmem:[%s3 + $0x8] sm:$0xff]
    %v65 = vld [vmem:[%s3 + $0x10] sm:$0xff]
    %v66 = vld [vmem:[%s3 + $0x18] sm:$0xff]
    %v67 = vld [vmem:[%s3 + $0x20] sm:$0xff]
    %v68 = vld [vmem:[%s3 + $0x28] sm:$0xff]
    %v69 = vld [vmem:[%s3 + $0x30] sm:$0xff]
    %v70 = vld [vmem:[%s3 + $0x38] sm:$0xff]
    %v71 = vld [vmem:[%s3 + $0x40] sm:$0xff]
    %v72 = vld [vmem:[%s3 + $0x48] sm:$0xff]
    %v73 = vld [vmem:[%s3 + $0x50] sm:$0xff]
    %v74 = vld [vmem:[%s3 + $0x58] sm:$0xff]
    %v75 = vld [vmem:[%s3 + $0x60] sm:$0xff]
    %v76 = vld [vmem:[%s3 + $0x68] sm:$0xff]
    %v77 = vld [vmem:[%s3 + $0x70] sm:$0xff]
    %v78 = vld [vmem:[%s3 + $0x78] sm:$0xff]
    %v79 = vld [vmem:[%s4] sm:$0x1]
    %v81 = vperm.slane %v79, 0
    %83 = vmatpush.msra.mxu0 %v78
    %84 = vmatpush.msra.mxu0 %v77
    %85 = vmatpush.msra.mxu0 %v76
    %86 = vmatpush.msra.mxu0 %v75
    %87 = vmatpush.msra.mxu0 %v74
    %88 = vmatpush.msra.mxu0 %v73
    %89 = vmatpush.msra.mxu0 %v72
    %90 = vmatpush.msra.mxu0 %v71
    %91 = vmatpush.msra.mxu0 %v70
    %92 = vmatpush.msra.mxu0 %v69
    %93 = vmatpush.msra.mxu0 %v68
    %94 = vmatpush.msra.mxu0 %v67
    %95 = vmatpush.msra.mxu0 %v66
    %96 = vmatpush.msra.mxu0 %v65
    %97 = vmatpush.msra.mxu0 %v64
    %98 = vmatpush.msra.mxu0 %v63
    %99 = vmatmul.f32.gmra.mxu0 %v61
    %v100 = vpop.f32.mrf.mxu0
    %v101 = vadd.f32 %v81, %v100
    %102 = vmatmul.f32.gmra.mxu0 %v62
    %v103 = vpop.f32.mrf.mxu0
    %v104 = vadd.f32 %v81, %v103
    %105 = vdwg.mxu0
    %v106 = vmax.f32 %v101, 0.0
    %v107 = vmax.f32 %v104, 0.0
    %v108 = vadd.f32 %v106, %v21
    %v109 = vadd.f32 %v107, %v22
    %110 = vst.msk [vmem:[#allocation2] sm:$0xff] %vm31, %v108
    %111 = vst.msk [vmem:[#allocation2 + $0x8] sm:$0xff] %vm31, %v109
    // Predicated region
    $region22: #{tpu_custom_call.1} parent=1 // pred_check
      _
    $region23: #{tpu_custom_call.1} parent=1 // pred_check_branch
      %113 = sbr.rel (0) target = $region25
    $region24: #{tpu_custom_call.1} parent=1 // pred_region
      %115 = vsyncadd [#allocation3], 0
      %s116 = sshll.u32 [#allocation2], 4
      %s117 = int_to_ptr.vmem [resolvable:$true] %s116
      %s118 = sshll.u32 %s5, 4
      %s119 = int_to_ptr.hbm [resolvable:$true] %s118
      %124 = dma.vmem_to_hbm [thread:$0]  %s117, 256, %s119, [#allocation3], 128, 128, 8
    $region25: #{tpu_custom_call.1} parent=1 // pred_fallthru
      _
    // Predicated region
    $region26: #{tpu_custom_call.1} parent=1 // pred_check
      _
    $region27: #{tpu_custom_call.1} parent=1 // pred_check_branch
      %126 = sbr.rel (0) target = $region29
    $region28: #{tpu_custom_call.1} parent=1 // pred_region
      %128 = dma.done [#allocation3], 256
    $region29: #{tpu_custom_call.1} parent=1 // pred_fallthru
      _
    %129 = vsyncpa [#allocation3], 1

</llo_original>
